<compile_context>
chip_gen: v6e
topology: v6e:2x2x1
jax: 0.10.0
libtpu: 0.0.40
codegen_flags: <defaults>
</compile_context>

<pallas_src>
import jax
import jax.numpy as jnp
from jax.experimental import pallas as pl
from jax.experimental.pallas import tpu as pltpu

LANE = 128
SUBLANE = 8


def _round_up(x, m):
    return (x + m - 1) // m * m


def _block_spec(shape, index_map, buffer_count=None):
    """BlockSpec with an optional explicit buffer count.

    Falls back to the default double-buffered spec if this jax build does not
    expose pipeline_mode / pl.Buffered.
    """
    if buffer_count is not None:
        try:
            return pl.BlockSpec(shape, index_map,
                                pipeline_mode=pl.Buffered(buffer_count))
        except Exception:  # pragma: no cover - older jax without pipeline_mode
            pass
    return pl.BlockSpec(shape, index_map)


def _make_mlp_kernel(num_hidden, row_tile):
    """Fused prompt-MLP kernel over a (col_tiles, row_tiles) grid.

    At column index 0 the whole hidden stack (first Linear+Tanh plus
    `num_hidden` middle Linear+Tanh layers) is computed for the current row
    tile and stored into the persistent VMEM h-scratch.  Every grid step then
    performs one (row_tile, mid) x (mid, col_tile) GEMM of the final Linear
    layer and writes its lane-dense output block.  Because rows are the inner
    axis, each wf column tile is fetched once and reused across all row tiles.
    """

    def kernel(x_ref, *refs):
        # refs = w0, b0, [wi, bi]*num_hidden, wf_tile, bf_tile, o_ref, h_scratch
        o_ref = refs[-2]
        h_ref = refs[-1]
        params = refs[:-2]

        j = pl.program_id(0)                       # output-column tile (outer)
        i = pl.program_id(1)                       # row tile (inner)
        r0 = pl.multiple_of(i * row_tile, row_tile)

        @pl.when(j == 0)
        def _():
            # Hidden stack for this row tile: bf16 operands, f32 accumulation,
            # bias + tanh in f32.  Stored into the persistent h scratch.
            h = x_ref[pl.ds(r0, row_tile), :]
            w0, b0 = params[0], params[1]
            acc = jnp.dot(h, w0[...], preferred_element_type=jnp.float32)
            h = jnp.tanh(acc + b0[...]).astype(h_ref.dtype)
            for l in range(num_hidden):
                w = params[2 + 2 * l]
                b = params[3 + 2 * l]
                acc = jnp.dot(h, w[...], preferred_element_type=jnp.float32)
                h = jnp.tanh(acc + b[...]).astype(h_ref.dtype)
            h_ref[pl.ds(r0, row_tile), :] = h

        # Final layer (no activation) on the current (row tile, column tile).
        wf, bf = params[-2], params[-1]
        h = h_ref[pl.ds(r0, row_tile), :]
        out = jnp.dot(h, wf[...], preferred_element_type=jnp.float32) + bf[...]
        o_ref[...] = out.astype(o_ref.dtype)

    return kernel


def prepare_params(params, *, compute_dtype=jnp.bfloat16):
    """Pad + cast the weight stack once (hoisted out of the per-call forward).

    params: list of (W, b) with W shape (in, out), b shape (1, out), float32.
    Returns (padded_params, meta).  Weights become lane-dense bf16 (in_p, out_p)
    arrays; biases stay f32, padded to (1, out_p).
    """
    embed_dim = params[0][0].shape[0]
    mid_dim = params[0][0].shape[1]
    out_dim = params[-1][0].shape[1]

    embed_p = _round_up(embed_dim, LANE)
    mid_p = _round_up(mid_dim, LANE)
    out_p = _round_up(out_dim, LANE)

    def pad_w(w, rp, cp):
        w = jnp.pad(w, ((0, rp - w.shape[0]), (0, cp - w.shape[1])))
        return w.astype(compute_dtype)

    def pad_b(b, cp):
        return jnp.pad(b, ((0, 0), (0, cp - b.shape[1]))).astype(jnp.float32)

    padded = [(pad_w(params[0][0], embed_p, mid_p), pad_b(params[0][1], mid_p))]
    for w, b in params[1:-1]:
        padded.append((pad_w(w, mid_p, mid_p), pad_b(b, mid_p)))
    padded.append((pad_w(params[-1][0], mid_p, out_p), pad_b(params[-1][1], out_p)))

    meta = dict(embed_dim=embed_dim, mid_dim=mid_dim, out_dim=out_dim,
                embed_p=embed_p, mid_p=mid_p, out_p=out_p,
                compute_dtype=compute_dtype)
    return padded, meta


def linear_prompt_layers_forward(prompt_states, padded_params, meta, *,
                                 row_tile=256, col_tile=512,
                                 out_dtype=jnp.float32):
    """Run the fused prompt-MLP on (..., embed_dim) inputs."""
    compute_dtype = meta["compute_dtype"]
    embed_dim, out_dim = meta["embed_dim"], meta["out_dim"]
    embed_p, mid_p, out_p = meta["embed_p"], meta["mid_p"], meta["out_p"]
    num_hidden = len(padded_params) - 2

    *lead, e = prompt_states.shape
    assert e == embed_dim, (e, embed_dim)
    n_rows = 1
    for d in lead:
        n_rows *= d

    # Row tiling: 256 fills the 256-wide MXU on v6e/v7x; shrink for tiny inputs.
    row_tile = min(row_tile, _round_up(max(n_rows, 1), SUBLANE))
    row_tile = _round_up(row_tile, SUBLANE)
    rows_p = _round_up(n_rows, row_tile)
    n_row = rows_p // row_tile

    # Column tiling: largest multiple of 128 that divides out_p and is <= the
    # requested tile, so no dead weight columns are streamed.
    col_tile = max(LANE, min(col_tile, out_p))
    col_tile = (col_tile // LANE) * LANE
    while out_p % col_tile != 0:
        col_tile -= LANE
    n_col = out_p // col_tile

    x2d = prompt_states.reshape(n_rows, embed_dim).astype(compute_dtype)
    x2d = jnp.pad(x2d, ((0, rows_p - n_rows), (0, embed_p - embed_dim)))

    # Buffer counts: constant-block operands need a single buffer; the streamed
    # final-layer tiles get an extra buffer when rows collapse to one tile.
    wf_bufs = 3 if n_row == 1 else 2
    wf_bufs = max(1, min(wf_bufs, n_col))

    flat_args = [x2d]
    # x: full-rows resident block (constant block index -> fetched once).
    in_specs = [_block_spec((rows_p, embed_p), lambda j, i: (0, 0), 1)]

    # First layer: embed_p -> mid_p (resident, single buffer).
    w0, b0 = padded_params[0]
    flat_args += [w0, b0]
    in_specs += [_block_spec((embed_p, mid_p), lambda j, i: (0, 0), 1),
                 _block_spec((1, mid_p), lambda j, i: (0, 0), 1)]

    # Middle layers: mid_p -> mid_p (resident, single buffer).
    for w, b in padded_params[1:-1]:
        flat_args += [w, b]
        in_specs += [_block_spec((mid_p, mid_p), lambda j, i: (0, 0), 1),
                     _block_spec((1, mid_p), lambda j, i: (0, 0), 1)]

    # Final layer: column-tiled and streamed; fetched once per column tile
    # because the column axis is the OUTER grid axis.
    wf, bf = padded_params[-1]
    flat_args += [wf, bf]
    in_specs += [_block_spec((mid_p, col_tile), lambda j, i: (0, j), wf_bufs),
                 _block_spec((1, col_tile), lambda j, i: (0, j), wf_bufs)]

    out_spec = pl.BlockSpec((row_tile, col_tile), lambda j, i: (i, j))
    grid = (n_col, n_row)

    # Honest VMEM estimate: single-buffered resident operands, bias sublane
    # padding (1 row pads to 8), f32 double-buffered output tiles, persistent
    # h scratch, plus the kernel's f32 GEMM intermediates.
    bc = jnp.dtype(compute_dtype).itemsize
    est = rows_p * embed_p * bc                                   # x (1 buffer)
    est += embed_p * mid_p * bc + SUBLANE * mid_p * 4             # w0, b0
    est += num_hidden * (mid_p * mid_p * bc + SUBLANE * mid_p * 4)
    est += wf_bufs * (mid_p * col_tile * bc + SUBLANE * col_tile * 4)
    est += 2 * row_tile * col_tile * jnp.dtype(out_dtype).itemsize
    est += rows_p * mid_p * bc                                    # h scratch
    est += 2 * row_tile * mid_p * 4 + row_tile * col_tile * 4     # f32 temps

    try:
        vmem_cap = int(pltpu.get_tpu_info().vmem_capacity_bytes)
    except Exception:  # pragma: no cover - conservative fallback
        vmem_cap = 64 * 1024 * 1024
    # Leave ~15% of physical VMEM as headroom for compiler internal scratch;
    # on v5e/v6e this allows well past 64 MiB, on v7x it stays under ~56 MiB.
    vmem_limit = min(int(vmem_cap * 0.85),
                     max(32 * 1024 * 1024, int(est * 1.25)))

    y2d = pl.pallas_call(
        _make_mlp_kernel(num_hidden, row_tile),
        out_shape=jax.ShapeDtypeStruct((rows_p, out_p), out_dtype),
        grid_spec=pltpu.PrefetchScalarGridSpec(
            num_scalar_prefetch=0,
            grid=grid,
            in_specs=in_specs,
            out_specs=out_spec,
            scratch_shapes=[pltpu.VMEM((rows_p, mid_p), compute_dtype)],
        ),
        compiler_params=pltpu.CompilerParams(
            # Column axis must stay "arbitrary" (h-scratch filled at j==0 and
            # reused); rows are independent and can shard across v7x cores.
            dimension_semantics=("arbitrary", "parallel"),
            vmem_limit_bytes=vmem_limit,
        ),
    )(*flat_args)

    y2d = y2d[:n_rows, :out_dim].astype(prompt_states.dtype)
    return y2d.reshape(*lead, out_dim)


def init_params(key, embed_dim, prompt_layers, model_layers):
    """Deterministically build the weight stack matching the PyTorch module."""
    mid_dim = embed_dim * 3 // 4
    kv = 2
    out_dim = embed_dim * model_layers * kv

    dims = [(embed_dim, mid_dim)]
    dims += [(mid_dim, mid_dim)] * (prompt_layers - 2)
    dims += [(mid_dim, out_dim)]

    params = []
    for (fan_in, fan_out) in dims:
        key, kw, kb = jax.random.split(key, 3)
        std = (2.0 / (fan_in + fan_out)) ** 0.5     # xavier-normal-like scale
        w = std * jax.random.normal(kw, (fan_in, fan_out), dtype=jnp.float32)
        b = 0.01 * jax.random.normal(kb, (1, fan_out), dtype=jnp.float32)
        params.append((w, b))
    return params


def reference_forward(prompt_states, params):
    """Plain-JAX f32 reference of the PyTorch forward."""
    h = prompt_states
    n = len(params)
    for idx, (w, b) in enumerate(params):
        h = jnp.dot(h, w) + b[0]
        if idx < n - 1:
            h = jnp.tanh(h)
    return h


if __name__ == "__main__":
    # Small, module-consistent config: d_model=32, prompt_layers=4, model_layers=2
    embed_dim = 32
    prompt_layers = 4
    model_layers = 2
    batch, seq = 2, 8

    key = jax.random.PRNGKey(0)
    key, kx = jax.random.split(key)
    prompt_states = jax.random.normal(kx, (batch, seq, embed_dim), dtype=jnp.float32)

    params = init_params(key, embed_dim, prompt_layers, model_layers)

    # Pad / cast weights once (hoisted out of the forward), then run the kernel.
    padded_params, meta = prepare_params(params)
    out = linear_prompt_layers_forward(prompt_states, padded_params, meta)
    out = jax.block_until_ready(out)

    ref = reference_forward(prompt_states, params)
    assert out.shape == (batch, seq, embed_dim * model_layers * 2), out.shape
    # bf16 operands / f32 accumulation => accepted precision contract vs f32 ref.
    assert jnp.allclose(out, ref, atol=5e-2, rtol=5e-2), "mismatch vs reference"

    print("KERNEL_OK")
</pallas_src>

<mosaic_0001>
module attributes {stable_mosaic.version = 11 : i64} {
  func.func @kernel(%arg0: i32, %arg1: i32, %arg2: memref<16x128xbf16, #tpu.memory_space<vmem>>, %arg3: memref<128x128xbf16, #tpu.memory_space<vmem>>, %arg4: memref<1x128xf32, #tpu.memory_space<vmem>>, %arg5: memref<128x128xbf16, #tpu.memory_space<vmem>>, %arg6: memref<1x128xf32, #tpu.memory_space<vmem>>, %arg7: memref<128x128xbf16, #tpu.memory_space<vmem>>, %arg8: memref<1x128xf32, #tpu.memory_space<vmem>>, %arg9: memref<128x128xbf16, #tpu.memory_space<vmem>>, %arg10: memref<1x128xf32, #tpu.memory_space<vmem>>, %arg11: memref<16x128xf32, #tpu.memory_space<vmem>>, %arg12: memref<16x128xbf16, #tpu.memory_space<vmem>>) attributes {dimension_semantics = [#tpu.dimension_semantics<arbitrary>, #tpu.dimension_semantics<parallel>], iteration_bounds = array<i64: 1, 1>, scalar_prefetch = 0 : i64, scratch_operands = 1 : i64, tpu.core_type = #tpu.core_type<tc>, window_params = [{pipeline_mode = #tpu.pipeline_mode<synchronous>, transform_indices = @transform_0, window_bounds = array<i64: 16, 128>}, {pipeline_mode = #tpu.pipeline_mode<synchronous>, transform_indices = @transform_1, window_bounds = array<i64: 128, 128>}, {pipeline_mode = #tpu.pipeline_mode<synchronous>, transform_indices = @transform_2, window_bounds = array<i64: 1, 128>}, {pipeline_mode = #tpu.pipeline_mode<synchronous>, transform_indices = @transform_3, window_bounds = array<i64: 128, 128>}, {pipeline_mode = #tpu.pipeline_mode<synchronous>, transform_indices = @transform_4, window_bounds = array<i64: 1, 128>}, {pipeline_mode = #tpu.pipeline_mode<synchronous>, transform_indices = @transform_5, window_bounds = array<i64: 128, 128>}, {pipeline_mode = #tpu.pipeline_mode<synchronous>, transform_indices = @transform_6, window_bounds = array<i64: 1, 128>}, {pipeline_mode = #tpu.pipeline_mode<synchronous>, transform_indices = @transform_7, window_bounds = array<i64: 128, 128>}, {pipeline_mode = #tpu.pipeline_mode<synchronous>, transform_indices = @transform_8, window_bounds = array<i64: 1, 128>}, {transform_indices = @transform_9, window_bounds = array<i64: 16, 128>}]} {
    %c16_i32 = arith.constant 16 : i32
    %0 = arith.muli %arg1, %c16_i32 : i32
    %1 = tpu.assume_multiple %0, 16 : i32
    %c0_i32 = arith.constant 0 : i32
    %2 = arith.cmpi eq, %arg0, %c0_i32 : i32
    %3 = arith.extui %2 : i1 to i32
    %c0_i32_0 = arith.constant 0 : i32
    %4 = arith.cmpi ne, %3, %c0_i32_0 : i32
    scf.if %4 {
      %13 = arith.index_cast %1 : i32 to index
      %c0_7 = arith.constant 0 : index
      %14 = vector.load %arg2[%13, %c0_7] : memref<16x128xbf16, #tpu.memory_space<vmem>>, vector<16x128xbf16>
      %c0_8 = arith.constant 0 : index
      %c0_9 = arith.constant 0 : index
      %15 = vector.load %arg3[%c0_8, %c0_9] : memref<128x128xbf16, #tpu.memory_space<vmem>>, vector<128x128xbf16>
      %cst_10 = arith.constant dense<0.000000e+00> : vector<16x128xf32>
      %16 = tpu.matmul %14, %15, %cst_10 {dimension_numbers = #tpu.dot_dimension_numbers<[1], [0], [0], [1], [0, 0, 1, 1], [], []>} : vector<16x128xbf16>, vector<128x128xbf16>, vector<16x128xf32> -> vector<16x128xf32>
      %c0_11 = arith.constant 0 : index
      %c0_12 = arith.constant 0 : index
      %17 = vector.load %arg4[%c0_11, %c0_12] : memref<1x128xf32, #tpu.memory_space<vmem>>, vector<1x128xf32>
      %18 = vector.broadcast %17 : vector<1x128xf32> to vector<16x128xf32>
      %19 = arith.addf %16, %18 : vector<16x128xf32>
      %20 = math.tanh %19 : vector<16x128xf32>
      %21 = arith.truncf %20 : vector<16x128xf32> to vector<16x128xbf16>
      %c0_13 = arith.constant 0 : index
      %c0_14 = arith.constant 0 : index
      %22 = vector.load %arg5[%c0_13, %c0_14] : memref<128x128xbf16, #tpu.memory_space<vmem>>, vector<128x128xbf16>
      %cst_15 = arith.constant dense<0.000000e+00> : vector<16x128xf32>
      %23 = tpu.matmul %21, %22, %cst_15 {dimension_numbers = #tpu.dot_dimension_numbers<[1], [0], [0], [1], [0, 0, 1, 1], [], []>} : vector<16x128xbf16>, vector<128x128xbf16>, vector<16x128xf32> -> vector<16x128xf32>
      %c0_16 = arith.constant 0 : index
      %c0_17 = arith.constant 0 : index
      %24 = vector.load %arg6[%c0_16, %c0_17] : memref<1x128xf32, #tpu.memory_space<vmem>>, vector<1x128xf32>
      %25 = vector.broadcast %24 : vector<1x128xf32> to vector<16x128xf32>
      %26 = arith.addf %23, %25 : vector<16x128xf32>
      %27 = math.tanh %26 : vector<16x128xf32>
      %28 = arith.truncf %27 : vector<16x128xf32> to vector<16x128xbf16>
      %c0_18 = arith.constant 0 : index
      %c0_19 = arith.constant 0 : index
      %29 = vector.load %arg7[%c0_18, %c0_19] : memref<128x128xbf16, #tpu.memory_space<vmem>>, vector<128x128xbf16>
      %cst_20 = arith.constant dense<0.000000e+00> : vector<16x128xf32>
      %30 = tpu.matmul %28, %29, %cst_20 {dimension_numbers = #tpu.dot_dimension_numbers<[1], [0], [0], [1], [0, 0, 1, 1], [], []>} : vector<16x128xbf16>, vector<128x128xbf16>, vector<16x128xf32> -> vector<16x128xf32>
      %c0_21 = arith.constant 0 : index
      %c0_22 = arith.constant 0 : index
      %31 = vector.load %arg8[%c0_21, %c0_22] : memref<1x128xf32, #tpu.memory_space<vmem>>, vector<1x128xf32>
      %32 = vector.broadcast %31 : vector<1x128xf32> to vector<16x128xf32>
      %33 = arith.addf %30, %32 : vector<16x128xf32>
      %34 = math.tanh %33 : vector<16x128xf32>
      %35 = arith.truncf %34 : vector<16x128xf32> to vector<16x128xbf16>
      %36 = arith.index_cast %1 : i32 to index
      %c0_23 = arith.constant 0 : index
      %37 = vector.load %arg12[%36, %c0_23] : memref<16x128xbf16, #tpu.memory_space<vmem>>, vector<16x128xbf16>
      tpu.vector_store %arg12[%36, %c0_23], %35 {strides = array<i32>} : memref<16x128xbf16, #tpu.memory_space<vmem>>, vector<16x128xbf16>,
    } else {
    }
    %5 = arith.index_cast %1 : i32 to index
    %c0 = arith.constant 0 : index
    %6 = vector.load %arg12[%5, %c0] : memref<16x128xbf16, #tpu.memory_space<vmem>>, vector<16x128xbf16>
    %c0_1 = arith.constant 0 : index
    %c0_2 = arith.constant 0 : index
    %7 = vector.load %arg9[%c0_1, %c0_2] : memref<128x128xbf16, #tpu.memory_space<vmem>>, vector<128x128xbf16>
    %cst = arith.constant dense<0.000000e+00> : vector<16x128xf32>
    %8 = tpu.matmul %6, %7, %cst {dimension_numbers = #tpu.dot_dimension_numbers<[1], [0], [0], [1], [0, 0, 1, 1], [], []>} : vector<16x128xbf16>, vector<128x128xbf16>, vector<16x128xf32> -> vector<16x128xf32>
    %c0_3 = arith.constant 0 : index
    %c0_4 = arith.constant 0 : index
    %9 = vector.load %arg10[%c0_3, %c0_4] : memref<1x128xf32, #tpu.memory_space<vmem>>, vector<1x128xf32>
    %10 = vector.broadcast %9 : vector<1x128xf32> to vector<16x128xf32>
    %11 = arith.addf %8, %10 : vector<16x128xf32>
    %c0_5 = arith.constant 0 : index
    %c0_6 = arith.constant 0 : index
    %12 = vector.load %arg11[%c0_5, %c0_6] : memref<16x128xf32, #tpu.memory_space<vmem>>, vector<16x128xf32>
    tpu.vector_store %arg11[%c0_5, %c0_6], %11 {strides = array<i32>} : memref<16x128xf32, #tpu.memory_space<vmem>>, vector<16x128xf32>,
    return
  }
  func.func @transform_0(%arg0: i32, %arg1: i32) -> (i32, i32) {
    %c0_i32 = arith.constant 0 : i32
    %c0_i32_0 = arith.constant 0 : i32
    %c0_i32_1 = arith.constant 0 : i32
    return %c0_i32, %c0_i32_0 : i32, i32
  }
  func.func @transform_1(%arg0: i32, %arg1: i32) -> (i32, i32) {
    %c0_i32 = arith.constant 0 : i32
    %c0_i32_0 = arith.constant 0 : i32
    %c0_i32_1 = arith.constant 0 : i32
    return %c0_i32, %c0_i32_0 : i32, i32
  }
  func.func @transform_2(%arg0: i32, %arg1: i32) -> (i32, i32) {
    %c0_i32 = arith.constant 0 : i32
    %c0_i32_0 = arith.constant 0 : i32
    %c0_i32_1 = arith.constant 0 : i32
    return %c0_i32, %c0_i32_0 : i32, i32
  }
  func.func @transform_3(%arg0: i32, %arg1: i32) -> (i32, i32) {
    %c0_i32 = arith.constant 0 : i32
    %c0_i32_0 = arith.constant 0 : i32
    %c0_i32_1 = arith.constant 0 : i32
    return %c0_i32, %c0_i32_0 : i32, i32
  }
  func.func @transform_4(%arg0: i32, %arg1: i32) -> (i32, i32) {
    %c0_i32 = arith.constant 0 : i32
    %c0_i32_0 = arith.constant 0 : i32
    %c0_i32_1 = arith.constant 0 : i32
    return %c0_i32, %c0_i32_0 : i32, i32
  }
  func.func @transform_5(%arg0: i32, %arg1: i32) -> (i32, i32) {
    %c0_i32 = arith.constant 0 : i32
    %c0_i32_0 = arith.constant 0 : i32
    %c0_i32_1 = arith.constant 0 : i32
    return %c0_i32, %c0_i32_0 : i32, i32
  }
  func.func @transform_6(%arg0: i32, %arg1: i32) -> (i32, i32) {
    %c0_i32 = arith.constant 0 : i32
    %c0_i32_0 = arith.constant 0 : i32
    %c0_i32_1 = arith.constant 0 : i32
    return %c0_i32, %c0_i32_0 : i32, i32
  }
  func.func @transform_7(%arg0: i32, %arg1: i32) -> (i32, i32) {
    %c0_i32 = arith.constant 0 : i32
    %c0_i32_0 = arith.constant 0 : i32
    return %c0_i32, %arg0 : i32, i32
  }
  func.func @transform_8(%arg0: i32, %arg1: i32) -> (i32, i32) {
    %c0_i32 = arith.constant 0 : i32
    %c0_i32_0 = arith.constant 0 : i32
    return %c0_i32, %arg0 : i32, i32
  }
  func.func @transform_9(%arg0: i32, %arg1: i32) -> (i32, i32) {
    %c0_i32 = arith.constant 0 : i32
    return %arg1, %arg0 : i32, i32
  }
}

</mosaic_0001>

<llo_original>
// kernel: tpu_custom_call.1
$region0: #{tpu_custom_call.1}
  #allocation0 [shape = 'u32[]', space=smem, size = 0x4, offset = 0x4, fixed_abs, tag = 'smem constant byte address 0x4 - core index']
  #allocation1 [shape = 'u32[144,128]{1,0:T(1,128)}', space=vmem, size = 0x12000, scoped, tag = 'internal scratch']
  #allocation2 [shape = 'bf16[16,128]{1,0:T(8,128)(2,1)}', space=vmem, size = 0x1000, scoped, tag = 'scratch operand']
  %s0 = inlined_call_operand.hbm [shape: bf16[16,128], index: 0, kind: input, shape index: {}]
  %s1 = inlined_call_operand.hbm [shape: bf16[128,128], index: 1, kind: input, shape index: {}]
  %s2 = inlined_call_operand.vmem [shape: f32[1,128], index: 2, kind: input, shape index: {}]
  %s3 = inlined_call_operand.hbm [shape: bf16[128,128], index: 3, kind: input, shape index: {}]
  %s4 = inlined_call_operand.vmem [shape: f32[1,128], index: 4, kind: input, shape index: {}]
  %s5 = inlined_call_operand.hbm [shape: bf16[128,128], index: 5, kind: input, shape index: {}]
  %s6 = inlined_call_operand.vmem [shape: f32[1,128], index: 6, kind: input, shape index: {}]
  %s7 = inlined_call_operand.hbm [shape: bf16[128,128], index: 7, kind: input, shape index: {}]
  %s8 = inlined_call_operand.vmem [shape: f32[1,128], index: 8, kind: input, shape index: {}]
  %s9 = inlined_call_operand.hbm [shape: f32[16,128], index: 9, kind: output, shape index: {}]
  %s10 = sld [smem:[#allocation0]]
  $region70: #{tpu_custom_call.1} parent=0
    _
  %s12 = ssub.s32 1, %s10
  %s13 = scalar_select 0, %s12, %s10
  $region1: #{tpu_custom_call.1} parent=0
    #allocation3 [shape = 'u8[4096]{0}', space=vmem, size = 0x1000, scoped, tag = 'input window, operand 0, single buffered']
    #allocation4 [shape = 's32[1]{0}', space=sflag, size = 0x4, scoped, tag = 'scoped memory for tpu_custom_call.1']
    #allocation5 [shape = 's32[1]{0}', space=sflag, size = 0x4, scoped, tag = 'scoped memory for tpu_custom_call.1']
    #allocation6 [shape = 'u8[32768]{0}', space=vmem, size = 0x8000, scoped, tag = 'input window, operand 1, single buffered']
    #allocation7 [shape = 's32[1]{0}', space=sflag, size = 0x4, scoped, tag = 'scoped memory for tpu_custom_call.1']
    #allocation8 [shape = 'u8[32768]{0}', space=vmem, size = 0x8000, scoped, tag = 'input window, operand 3, single buffered']
    #allocation9 [shape = 'u8[32768]{0}', space=vmem, size = 0x8000, scoped, tag = 'input window, operand 5, single buffered']
    #allocation10 [shape = 's32[1]{0}', space=sflag, size = 0x4, scoped, tag = 'scoped memory for tpu_custom_call.1']
    #allocation11 [shape = 'u8[32768]{0}', space=vmem, size = 0x8000, scoped, tag = 'input window, operand 7, single buffered']
    #allocation12 [shape = 'u8[8192]{0}', space=vmem, size = 0x2000, scoped, tag = 'output window, operand 0, single buffered']
    %14 = vsyncpa [#allocation4], 0
    %15 = vsyncpa [#allocation7], 0
    %16 = vsyncpa [#allocation10], 0
    %17 = vsyncpa [#allocation5], 0
    // Predicated region
    $region2: #{tpu_custom_call.1} parent=1 // pred_check
      _
    $region3: #{tpu_custom_call.1} parent=1 // pred_check_branch
      %19 = sbr.rel (0) target = $region5
    $region4: #{tpu_custom_call.1} parent=1 // pred_region
      %s21 = ssub.s32 128, 128
      %22 = vsyncadd [#allocation4], %s21
      %s23 = sshll.u32 [#allocation3], 4
      %s24 = int_to_ptr.vmem [resolvable:$true] %s23
      %29 = dma.hbm_to_vmem [thread:$0]  %s0, 128, %s24, [#allocation4], 64, 64, 4
    $region5: #{tpu_custom_call.1} parent=1 // pred_fallthru
      _
    // Predicated region
    $region6: #{tpu_custom_call.1} parent=1 // pred_check
      _
    $region7: #{tpu_custom_call.1} parent=1 // pred_check_branch
      %31 = sbr.rel (0) target = $region9
    $region8: #{tpu_custom_call.1} parent=1 // pred_region
      %s33 = ssub.s32 1024, 1024
      %34 = vsyncadd [#allocation7], %s33
      %s35 = sshll.u32 [#allocation6], 4
      %s36 = int_to_ptr.vmem [resolvable:$true] %s35
      %41 = dma.hbm_to_vmem [thread:$0]  %s1, 1024, %s36, [#allocation7], 64, 64, 4
    $region9: #{tpu_custom_call.1} parent=1 // pred_fallthru
      _
    // Predicated region
    $region10: #{tpu_custom_call.1} parent=1 // pred_check
      _
    $region11: #{tpu_custom_call.1} parent=1 // pred_check_branch
      %43 = sbr.rel (0) target = $region13
    $region12: #{tpu_custom_call.1} parent=1 // pred_region
      _
    $region13: #{tpu_custom_call.1} parent=1 // pred_fallthru
      _
    // Predicated region
    $region14: #{tpu_custom_call.1} parent=1 // pred_check
      _
    $region15: #{tpu_custom_call.1} parent=1 // pred_check_branch
      %45 = sbr.rel (0) target = $region17
    $region16: #{tpu_custom_call.1} parent=1 // pred_region
      %s47 = ssub.s32 1024, 1024
      %48 = vsyncadd [#allocation7], %s47
      %s49 = sshll.u32 [#allocation8], 4
      %s50 = int_to_ptr.vmem [resolvable:$true] %s49
      %55 = dma.hbm_to_vmem [thread:$0]  %s3, 1024, %s50, [#allocation7], 64, 64, 4
    $region17: #{tpu_custom_call.1} parent=1 // pred_fallthru
      _
    // Predicated region
    $region18: #{tpu_custom_call.1} parent=1 // pred_check
      _
    $region19: #{tpu_custom_call.1} parent=1 // pred_check_branch
      %57 = sbr.rel (0) target = $region21
    $region20: #{tpu_custom_call.1} parent=1 // pred_region
      _
    $region21: #{tpu_custom_call.1} parent=1 // pred_fallthru
      _
    // Predicated region
    $region22: #{tpu_custom_call.1} parent=1 // pred_check
      _
    $region23: #{tpu_custom_call.1} parent=1 // pred_check_branch
      %59 = sbr.rel (0) target = $region25
    $region24: #{tpu_custom_call.1} parent=1 // pred_region
      %s61 = ssub.s32 1024, 1024
      %62 = vsyncadd [#allocation10], %s61
      %s63 = sshll.u32 [#allocation9], 4
      %s64 = int_to_ptr.vmem [resolvable:$true] %s63
      %69 = dma.hbm_to_vmem [thread:$0]  %s5, 1024, %s64, [#allocation10], 64, 64, 4
    $region25: #{tpu_custom_call.1} parent=1 // pred_fallthru
      _
    // Predicated region
    $region26: #{tpu_custom_call.1} parent=1 // pred_check
      _
    $region27: #{tpu_custom_call.1} parent=1 // pred_check_branch
      %71 = sbr.rel (0) target = $region29
    $region28: #{tpu_custom_call.1} parent=1 // pred_region
      _
    $region29: #{tpu_custom_call.1} parent=1 // pred_fallthru
      _
    // Predicated region
    $region30: #{tpu_custom_call.1} parent=1 // pred_check
      _
    $region31: #{tpu_custom_call.1} parent=1 // pred_check_branch
      %73 = sbr.rel (0) target = $region33
    $region32: #{tpu_custom_call.1} parent=1 // pred_region
      %s75 = ssub.s32 1024, 1024
      %76 = vsyncadd [#allocation10], %s75
      %s77 = sshll.u32 [#allocation11], 4
      %s78 = int_to_ptr.vmem [resolvable:$true] %s77
      %83 = dma.hbm_to_vmem [thread:$0]  %s7, 1024, %s78, [#allocation10], 64, 64, 4
    $region33: #{tpu_custom_call.1} parent=1 // pred_fallthru
      _
    // Predicated region
    $region34: #{tpu_custom_call.1} parent=1 // pred_check
      _
    $region35: #{tpu_custom_call.1} parent=1 // pred_check_branch
      %85 = sbr.rel (0) target = $region37
    $region36: #{tpu_custom_call.1} parent=1 // pred_region
      _
    $region37: #{tpu_custom_call.1} parent=1 // pred_fallthru
      _
    // Predicated region
    $region38: #{tpu_custom_call.1} parent=1 // pred_check
      _
    $region39: #{tpu_custom_call.1} parent=1 // pred_check_branch
      %87 = sbr.rel (0) target = $region41
    $region40: #{tpu_custom_call.1} parent=1 // pred_region
      %88 = dma.done [#allocation4], 128
    $region41: #{tpu_custom_call.1} parent=1 // pred_fallthru
      _
    // Predicated region
    $region42: #{tpu_custom_call.1} parent=1 // pred_check
      _
    $region43: #{tpu_custom_call.1} parent=1 // pred_check_branch
      %90 = sbr.rel (0) target = $region45
    $region44: #{tpu_custom_call.1} parent=1 // pred_region
      %91 = dma.done [#allocation7], 1024
    $region45: #{tpu_custom_call.1} parent=1 // pred_fallthru
      _
    // Predicated region
    $region46: #{tpu_custom_call.1} parent=1 // pred_check
      _
    $region47: #{tpu_custom_call.1} parent=1 // pred_check_branch
      %93 = sbr.rel (0) target = $region49
    $region48: #{tpu_custom_call.1} parent=1 // pred_region
      %94 = dma.done [#allocation7], 1024
    $region49: #{tpu_custom_call.1} parent=1 // pred_fallthru
      _
    // Predicated region
    $region50: #{tpu_custom_call.1} parent=1 // pred_check
      _
    $region51: #{tpu_custom_call.1} parent=1 // pred_check_branch
      %96 = sbr.rel (0) target = $region53
    $region52: #{tpu_custom_call.1} parent=1 // pred_region
      %97 = dma.done [#allocation10], 1024
    $region53: #{tpu_custom_call.1} parent=1 // pred_fallthru
      _
    // Predicated region
    $region54: #{tpu_custom_call.1} parent=1 // pred_check
      _
    $region55: #{tpu_custom_call.1} parent=1 // pred_check_branch
      %99 = sbr.rel (0) target = $region57
    $region56: #{tpu_custom_call.1} parent=1 // pred_region
      %100 = dma.done [#allocation10], 1024
    $region57: #{tpu_custom_call.1} parent=1 // pred_fallthru
      _
    %s102 = smul.u32 0, 16
    %p103 = scmp.eq.s32.totalorder 0, 0
    // Predicated region
    $region58: #{tpu_custom_call.1} parent=1 // pred_check
      %p104 = pneg %p103
    $region59: #{tpu_custom_call.1} parent=1 // pred_check_branch
      %106 = sbr.rel (%p104) target = $region61
    $region60: #{tpu_custom_call.1} parent=1 // pred_region
      %s107 = sshra.s32 %s102, 3
      %s108 = sand.u32 %s102, 7
      %s109 = smul.addr %s107, 4
      %s110 = scalar_lea.vmem [#allocation3], %s109
      %v111 = vld [vmem:[%s110] sm:$0xf]
      %v112 = vld [vmem:[%s110 + $0x4] sm:$0xf]
      %v113 = vld [vmem:[#allocation6] sm:$0xf]
      %v114 = vld [vmem:[#allocation6 + $0x4] sm:$0xf]
      %v115 = vld [vmem:[#allocation6 + $0x8] sm:$0xf]
      %v116 = vld [vmem:[#allocation6 + $0xc] sm:$0xf]
      %v117 = vld [vmem:[#allocation6 + $0x10] sm:$0xf]
      %v118 = vld [vmem:[#allocation6 + $0x14] sm:$0xf]
      %v119 = vld [vmem:[#allocation6 + $0x18] sm:$0xf]
      %v120 = vld [vmem:[#allocation6 + $0x1c] sm:$0xf]
      %v121 = vld [vmem:[#allocation6 + $0x20] sm:$0xf]
      %v122 = vld [vmem:[#allocation6 + $0x24] sm:$0xf]
      %v123 = vld [vmem:[#allocation6 + $0x28] sm:$0xf]
      %v124 = vld [vmem:[#allocation6 + $0x2c] sm:$0xf]
      %v125 = vld [vmem:[#allocation6 + $0x30] sm:$0xf]
      %v126 = vld [vmem:[#allocation6 + $0x34] sm:$0xf]
      %v127 = vld [vmem:[#allocation6 + $0x38] sm:$0xf]
      %v128 = vld [vmem:[#allocation6 + $0x3c] sm:$0xf]
      %v129 = vld [vmem:[%s2] sm:$0x1]
      %v131 = vlaneseq
      %v132 = vshrl.u32 %v131, 7
      %v133 = vsub.s32 0, %v132
      %v134 = vrot.slane %v129, %v133
      %v138 = vunpack.c.l.b16 %v111
      %v139 = vunpack.c.l.b16 %v112
      %v140 = vpack.c.b16 %v139, %v138
      %v158 = vunpack.c.l.b16 %v113
      %v159 = vunpack.c.l.b16 %v114
      %v160 = vunpack.c.l.b16 %v115
      %v161 = vunpack.c.l.b16 %v116
      %v162 = vunpack.c.l.b16 %v117
      %v163 = vunpack.c.l.b16 %v118
      %v164 = vunpack.c.l.b16 %v119
      %v165 = vunpack.c.l.b16 %v120
      %v166 = vunpack.c.l.b16 %v121
      %v167 = vunpack.c.l.b16 %v122
      %v168 = vunpack.c.l.b16 %v123
      %v169 = vunpack.c.l.b16 %v124
      %v170 = vunpack.c.l.b16 %v125
      %v171 = vunpack.c.l.b16 %v126
      %v172 = vunpack.c.l.b16 %v127
      %v173 = vunpack.c.l.b16 %v128
      %v174 = vpack.c.b16 %v159, %v158
      %v175 = vpack.c.b16 %v161, %v160
      %v176 = vpack.c.b16 %v163, %v162
      %v177 = vpack.c.b16 %v165, %v164
      %v178 = vpack.c.b16 %v167, %v166
      %v179 = vpack.c.b16 %v169, %v168
      %v180 = vpack.c.b16 %v171, %v170
      %v181 = vpack.c.b16 %v173, %v172
      %190 = vmatprep.subr.bf16.mxu0 0
      %191 = vmatpush1.bf16.msra.mxu0 %v181
      %192 = vmatprep.subr.bf16.mxu0 0
      %193 = vmatpush1.bf16.msra.mxu0 %v180
      %194 = vmatprep.subr.bf16.mxu0 0
      %195 = vmatpush1.bf16.msra.mxu0 %v179
      %196 = vmatprep.subr.bf16.mxu0 0
      %197 = vmatpush1.bf16.msra.mxu0 %v178
      %198 = vmatprep.subr.bf16.mxu0 0
      %199 = vmatpush1.bf16.msra.mxu0 %v177
      %200 = vmatprep.subr.bf16.mxu0 0
      %201 = vmatpush1.bf16.msra.mxu0 %v176
      %202 = vmatprep.subr.bf16.mxu0 0
      %203 = vmatpush1.bf16.msra.mxu0 %v175
      %204 = vmatprep.subr.bf16.mxu0 0
      %205 = vmatpush1.bf16.msra.mxu0 %v174
      %206 = vmatprep.subr.bf16.mxu0 0
      %207 = vmatpush2.bf16.msra.mxu0 0
      %208 = vmatprep.subr.bf16.mxu0 0
      %209 = vmatpush2.bf16.msra.mxu0 0
      %210 = vmatprep.subr.bf16.mxu0 0
      %211 = vmatpush2.bf16.msra.mxu0 0
      %212 = vmatprep.subr.bf16.mxu0 0
      %213 = vmatpush2.bf16.msra.mxu0 0
      %214 = vmatprep.subr.bf16.mxu0 0
      %215 = vmatpush2.bf16.msra.mxu0 0
      %216 = vmatprep.subr.bf16.mxu0 0
      %217 = vmatpush2.bf16.msra.mxu0 0
      %218 = vmatprep.subr.bf16.mxu0 0
      %219 = vmatpush2.bf16.msra.mxu0 0
      %220 = vmatprep.subr.bf16.mxu0 0
      %221 = vmatpush2.bf16.msra.mxu0 0
      %222 = vmatprep.mubr.bf16.mxu0 0
      %223 = vmatmul.mubr.bf16.gmra.mxu0 %v140
      %v224 = vpop.f32.mrf.mxu0
      %v225 = vadd.f32 %v134, %v224
      %v226 = vpop.f32.mrf.mxu0
      %v227 = vpop.f32.mrf.mxu0
      %v228 = vadd.f32 %v134, %v227
      %v229 = vpop.f32.mrf.mxu0
      %230 = vdwg.mxu0
      %v231 = vtanh.pop %v225
      %v232 = vtanh.pop %v228
      %v233 = vpack.c.bf16 %v232, %v231
      %v234 = vld [vmem:[#allocation8] sm:$0xf]
      %v235 = vld [vmem:[#allocation8 + $0x4] sm:$0xf]
      %v236 = vld [vmem:[#allocation8 + $0x8] sm:$0xf]
      %v237 = vld [vmem:[#allocation8 + $0xc] sm:$0xf]
      %v238 = vld [vmem:[#allocation8 + $0x10] sm:$0xf]
      %v239 = vld [vmem:[#allocation8 + $0x14] sm:$0xf]
      %v240 = vld [vmem:[#allocation8 + $0x18] sm:$0xf]
      %v241 = vld [vmem:[#allocation8 + $0x1c] sm:$0xf]
      %v242 = vld [vmem:[#allocation8 + $0x20] sm:$0xf]
      %v243 = vld [vmem:[#allocation8 + $0x24] sm:$0xf]
      %v244 = vld [vmem:[#allocation8 + $0x28] sm:$0xf]
      %v245 = vld [vmem:[#allocation8 + $0x2c] sm:$0xf]
      %v246 = vld [vmem:[#allocation8 + $0x30] sm:$0xf]
      %v247 = vld [vmem:[#allocation8 + $0x34] sm:$0xf]
      %v248 = vld [vmem:[#allocation8 + $0x38] sm:$0xf]
      %v249 = vld [vmem:[#allocation8 + $0x3c] sm:$0xf]
      %v250 = vld [vmem:[%s4] sm:$0x1]
      %v252 = vlaneseq
      %v253 = vshrl.u32 %v252, 7
      %v254 = vsub.s32 0, %v253
      %v255 = vrot.slane %v250, %v254
      %v273 = vunpack.c.l.b16 %v234
      %v274 = vunpack.c.l.b16 %v235
      %v275 = vunpack.c.l.b16 %v236
      %v276 = vunpack.c.l.b16 %v237
      %v277 = vunpack.c.l.b16 %v238
      %v278 = vunpack.c.l.b16 %v239
      %v279 = vunpack.c.l.b16 %v240
      %v280 = vunpack.c.l.b16 %v241
      %v281 = vunpack.c.l.b16 %v242
      %v282 = vunpack.c.l.b16 %v243
      %v283 = vunpack.c.l.b16 %v244
      %v284 = vunpack.c.l.b16 %v245
      %v285 = vunpack.c.l.b16 %v246
      %v286 = vunpack.c.l.b16 %v247
      %v287 = vunpack.c.l.b16 %v248
      %v288 = vunpack.c.l.b16 %v249
      %v289 = vpack.c.b16 %v274, %v273
      %v290 = vpack.c.b16 %v276, %v275
      %v291 = vpack.c.b16 %v278, %v277
      %v292 = vpack.c.b16 %v280, %v279
      %v293 = vpack.c.b16 %v282, %v281
      %v294 = vpack.c.b16 %v284, %v283
      %v295 = vpack.c.b16 %v286, %v285
      %v296 = vpack.c.b16 %v288, %v287
      %305 = vmatprep.subr.bf16.mxu0 0
      %306 = vmatpush1.bf16.msra.mxu0 %v296
      %307 = vmatprep.subr.bf16.mxu0 0
      %308 = vmatpush1.bf16.msra.mxu0 %v295
      %309 = vmatprep.subr.bf16.mxu0 0
      %310 = vmatpush1.bf16.msra.mxu0 %v294
      %311 = vmatprep.subr.bf16.mxu0 0
      %312 = vmatpush1.bf16.msra.mxu0 %v293
      %313 = vmatprep.subr.bf16.mxu0 0
      %314 = vmatpush1.bf16.msra.mxu0 %v292
      %315 = vmatprep.subr.bf16.mxu0 0
      %316 = vmatpush1.bf16.msra.mxu0 %v291
      %317 = vmatprep.subr.bf16.mxu0 0
      %318 = vmatpush1.bf16.msra.mxu0 %v290
      %319 = vmatprep.subr.bf16.mxu0 0
      %320 = vmatpush1.bf16.msra.mxu0 %v289
      %321 = vmatprep.subr.bf16.mxu0 0
      %322 = vmatpush2.bf16.msra.mxu0 0
      %323 = vmatprep.subr.bf16.mxu0 0
      %324 = vmatpush2.bf16.msra.mxu0 0
      %325 = vmatprep.subr.bf16.mxu0 0
      %326 = vmatpush2.bf16.msra.mxu0 0
      %327 = vmatprep.subr.bf16.mxu0 0
      %328 = vmatpush2.bf16.msra.mxu0 0
      %329 = vmatprep.subr.bf16.mxu0 0
      %330 = vmatpush2.bf16.msra.mxu0 0
      %331 = vmatprep.subr.bf16.mxu0 0
      %332 = vmatpush2.bf16.msra.mxu0 0
      %333 = vmatprep.subr.bf16.mxu0 0
      %334 = vmatpush2.bf16.msra.mxu0 0
      %335 = vmatprep.subr.bf16.mxu0 0
      %336 = vmatpush2.bf16.msra.mxu0 0
      %337 = vmatprep.mubr.bf16.mxu0 0
      %338 = vmatmul.mubr.bf16.gmra.mxu0 %v233
      %v339 = vpop.f32.mrf.mxu0
      %v340 = vadd.f32 %v255, %v339
      %v341 = vpop.f32.mrf.mxu0
      %v342 = vpop.f32.mrf.mxu0
      %v343 = vadd.f32 %v255, %v342
      %v344 = vpop.f32.mrf.mxu0
      %345 = vdwg.mxu0
      %v346 = vtanh.pop %v340
      %v347 = vtanh.pop %v343
      %v348 = vpack.c.bf16 %v347, %v346
      %v349 = vld [vmem:[#allocation9] sm:$0xf]
      %v350 = vld [vmem:[#allocation9 + $0x4] sm:$0xf]
      %v351 = vld [vmem:[#allocation9 + $0x8] sm:$0xf]
      %v352 = vld [vmem:[#allocation9 + $0xc] sm:$0xf]
      %v353 = vld [vmem:[#allocation9 + $0x10] sm:$0xf]
      %v354 = vld [vmem:[#allocation9 + $0x14] sm:$0xf]
      %v355 = vld [vmem:[#allocation9 + $0x18] sm:$0xf]
      %v356 = vld [vmem:[#allocation9 + $0x1c] sm:$0xf]
      %v357 = vld [vmem:[#allocation9 + $0x20] sm:$0xf]
      %v358 = vld [vmem:[#allocation9 + $0x24] sm:$0xf]
      %v359 = vld [vmem:[#allocation9 + $0x28] sm:$0xf]
      %v360 = vld [vmem:[#allocation9 + $0x2c] sm:$0xf]
      %v361 = vld [vmem:[#allocation9 + $0x30] sm:$0xf]
      %v362 = vld [vmem:[#allocation9 + $0x34] sm:$0xf]
      %v363 = vld [vmem:[#allocation9 + $0x38] sm:$0xf]
      %v364 = vld [vmem:[#allocation9 + $0x3c] sm:$0xf]
      %v365 = vld [vmem:[%s6] sm:$0x1]
      %v367 = vlaneseq
      %v368 = vshrl.u32 %v367, 7
      %v369 = vsub.s32 0, %v368
      %v370 = vrot.slane %v365, %v369
      %v388 = vunpack.c.l.b16 %v349
      %v389 = vunpack.c.l.b16 %v350
      %v390 = vunpack.c.l.b16 %v351
      %v391 = vunpack.c.l.b16 %v352
      %v392 = vunpack.c.l.b16 %v353
      %v393 = vunpack.c.l.b16 %v354
      %v394 = vunpack.c.l.b16 %v355
      %v395 = vunpack.c.l.b16 %v356
      %v396 = vunpack.c.l.b16 %v357
      %v397 = vunpack.c.l.b16 %v358
      %v398 = vunpack.c.l.b16 %v359
      %v399 = vunpack.c.l.b16 %v360
      %v400 = vunpack.c.l.b16 %v361
      %v401 = vunpack.c.l.b16 %v362
      %v402 = vunpack.c.l.b16 %v363
      %v403 = vunpack.c.l.b16 %v364
      %v404 = vpack.c.b16 %v389, %v388
      %v405 = vpack.c.b16 %v391, %v390
      %v406 = vpack.c.b16 %v393, %v392
      %v407 = vpack.c.b16 %v395, %v394
      %v408 = vpack.c.b16 %v397, %v396
      %v409 = vpack.c.b16 %v399, %v398
      %v410 = vpack.c.b16 %v401, %v400
      %v411 = vpack.c.b16 %v403, %v402
      %420 = vmatprep.subr.bf16.mxu0 0
      %421 = vmatpush1.bf16.msra.mxu0 %v411
      %422 = vmatprep.subr.bf16.mxu0 0
      %423 = vmatpush1.bf16.msra.mxu0 %v410
      %424 = vmatprep.subr.bf16.mxu0 0
      %425 = vmatpush1.bf16.msra.mxu0 %v409
      %426 = vmatprep.subr.bf16.mxu0 0
      %427 = vmatpush1.bf16.msra.mxu0 %v408
      %428 = vmatprep.subr.bf16.mxu0 0
      %429 = vmatpush1.bf16.msra.mxu0 %v407
      %430 = vmatprep.subr.bf16.mxu0 0
      %431 = vmatpush1.bf16.msra.mxu0 %v406
      %432 = vmatprep.subr.bf16.mxu0 0
      %433 = vmatpush1.bf16.msra.mxu0 %v405
      %434 = vmatprep.subr.bf16.mxu0 0
      %435 = vmatpush1.bf16.msra.mxu0 %v404
      %436 = vmatprep.subr.bf16.mxu0 0
      %437 = vmatpush2.bf16.msra.mxu0 0
      %438 = vmatprep.subr.bf16.mxu0 0
      %439 = vmatpush2.bf16.msra.mxu0 0
      %440 = vmatprep.subr.bf16.mxu0 0
      %441 = vmatpush2.bf16.msra.mxu0 0
      %442 = vmatprep.subr.bf16.mxu0 0
      %443 = vmatpush2.bf16.msra.mxu0 0
      %444 = vmatprep.subr.bf16.mxu0 0
      %445 = vmatpush2.bf16.msra.mxu0 0
      %446 = vmatprep.subr.bf16.mxu0 0
      %447 = vmatpush2.bf16.msra.mxu0 0
      %448 = vmatprep.subr.bf16.mxu0 0
      %449 = vmatpush2.bf16.msra.mxu0 0
      %450 = vmatprep.subr.bf16.mxu0 0
      %451 = vmatpush2.bf16.msra.mxu0 0
      %452 = vmatprep.mubr.bf16.mxu0 0
      %453 = vmatmul.mubr.bf16.gmra.mxu0 %v348
      %v454 = vpop.f32.mrf.mxu0
      %v455 = vadd.f32 %v370, %v454
      %v456 = vpop.f32.mrf.mxu0
      %v457 = vpop.f32.mrf.mxu0
      %v458 = vadd.f32 %v370, %v457
      %v459 = vpop.f32.mrf.mxu0
      %460 = vdwg.mxu0
      %v461 = vtanh.pop %v455
      %v462 = vtanh.pop %v458
      %v463 = vpack.c.bf16 %v462, %v461
      %v465 = vunpack.c.l.b16 %v463
      %v466 = vunpack.c.h.b16 %v463
      %v467 = vpack.c.b16 %v465, %v465
      %v468 = vpack.c.b16 %v466, %v466
      %s471 = smul.addr %s107, 4
      %s472 = scalar_lea.vmem [#allocation2], %s471
      %473 = vst [vmem:[%s472] sm:$0xf] %v467
      %474 = vst [vmem:[%s472 + $0x4] sm:$0xf] %v468
    $region61: #{tpu_custom_call.1} parent=1 // pred_fallthru
      _
    %s475 = sshra.s32 %s102, 3
    %s476 = sand.u32 %s102, 7
    %s477 = smul.addr %s475, 4
    %s478 = scalar_lea.vmem [#allocation2], %s477
    %v479 = vld [vmem:[%s478] sm:$0xf]
    %v480 = vld [vmem:[%s478 + $0x4] sm:$0xf]
    %v481 = vld [vmem:[#allocation11] sm:$0xf]
    %v482 = vld [vmem:[#allocation11 + $0x4] sm:$0xf]
    %v483 = vld [vmem:[#allocation11 + $0x8] sm:$0xf]
    %v484 = vld [vmem:[#allocation11 + $0xc] sm:$0xf]
    %v485 = vld [vmem:[#allocation11 + $0x10] sm:$0xf]
    %v486 = vld [vmem:[#allocation11 + $0x14] sm:$0xf]
    %v487 = vld [vmem:[#allocation11 + $0x18] sm:$0xf]
    %v488 = vld [vmem:[#allocation11 + $0x1c] sm:$0xf]
    %v489 = vld [vmem:[#allocation11 + $0x20] sm:$0xf]
    %v490 = vld [vmem:[#allocation11 + $0x24] sm:$0xf]
    %v491 = vld [vmem:[#allocation11 + $0x28] sm:$0xf]
    %v492 = vld [vmem:[#allocation11 + $0x2c] sm:$0xf]
    %v493 = vld [vmem:[#allocation11 + $0x30] sm:$0xf]
    %v494 = vld [vmem:[#allocation11 + $0x34] sm:$0xf]
    %v495 = vld [vmem:[#allocation11 + $0x38] sm:$0xf]
    %v496 = vld [vmem:[#allocation11 + $0x3c] sm:$0xf]
    %v497 = vld [vmem:[%s8] sm:$0x1]
    %v499 = vlaneseq
    %v500 = vshrl.u32 %v499, 7
    %v501 = vsub.s32 0, %v500
    %v502 = vrot.slane %v497, %v501
    %v506 = vunpack.c.l.b16 %v479
    %v507 = vunpack.c.l.b16 %v480
    %v508 = vpack.c.b16 %v507, %v506
    %v526 = vunpack.c.l.b16 %v481
    %v527 = vunpack.c.l.b16 %v482
    %v528 = vunpack.c.l.b16 %v483
    %v529 = vunpack.c.l.b16 %v484
    %v530 = vunpack.c.l.b16 %v485
    %v531 = vunpack.c.l.b16 %v486
    %v532 = vunpack.c.l.b16 %v487
    %v533 = vunpack.c.l.b16 %v488
    %v534 = vunpack.c.l.b16 %v489
    %v535 = vunpack.c.l.b16 %v490
    %v536 = vunpack.c.l.b16 %v491
    %v537 = vunpack.c.l.b16 %v492
    %v538 = vunpack.c.l.b16 %v493
    %v539 = vunpack.c.l.b16 %v494
    %v540 = vunpack.c.l.b16 %v495
    %v541 = vunpack.c.l.b16 %v496
    %v542 = vpack.c.b16 %v527, %v526
    %v543 = vpack.c.b16 %v529, %v528
    %v544 = vpack.c.b16 %v531, %v530
    %v545 = vpack.c.b16 %v533, %v532
    %v546 = vpack.c.b16 %v535, %v534
    %v547 = vpack.c.b16 %v537, %v536
    %v548 = vpack.c.b16 %v539, %v538
    %v549 = vpack.c.b16 %v541, %v540
    %558 = vmatprep.subr.bf16.mxu0 0
    %559 = vmatpush1.bf16.msra.mxu0 %v549
    %560 = vmatprep.subr.bf16.mxu0 0
    %561 = vmatpush1.bf16.msra.mxu0 %v548
    %562 = vmatprep.subr.bf16.mxu0 0
    %563 = vmatpush1.bf16.msra.mxu0 %v547
    %564 = vmatprep.subr.bf16.mxu0 0
    %565 = vmatpush1.bf16.msra.mxu0 %v546
    %566 = vmatprep.subr.bf16.mxu0 0
    %567 = vmatpush1.bf16.msra.mxu0 %v545
    %568 = vmatprep.subr.bf16.mxu0 0
    %569 = vmatpush1.bf16.msra.mxu0 %v544
    %570 = vmatprep.subr.bf16.mxu0 0
    %571 = vmatpush1.bf16.msra.mxu0 %v543
    %572 = vmatprep.subr.bf16.mxu0 0
    %573 = vmatpush1.bf16.msra.mxu0 %v542
    %574 = vmatprep.subr.bf16.mxu0 0
    %575 = vmatpush2.bf16.msra.mxu0 0
    %576 = vmatprep.subr.bf16.mxu0 0
    %577 = vmatpush2.bf16.msra.mxu0 0
    %578 = vmatprep.subr.bf16.mxu0 0
    %579 = vmatpush2.bf16.msra.mxu0 0
    %580 = vmatprep.subr.bf16.mxu0 0
    %581 = vmatpush2.bf16.msra.mxu0 0
    %582 = vmatprep.subr.bf16.mxu0 0
    %583 = vmatpush2.bf16.msra.mxu0 0
    %584 = vmatprep.subr.bf16.mxu0 0
    %585 = vmatpush2.bf16.msra.mxu0 0
    %586 = vmatprep.subr.bf16.mxu0 0
    %587 = vmatpush2.bf16.msra.mxu0 0
    %588 = vmatprep.subr.bf16.mxu0 0
    %589 = vmatpush2.bf16.msra.mxu0 0
    %590 = vmatprep.mubr.bf16.mxu0 0
    %591 = vmatmul.mubr.bf16.gmra.mxu0 %v508
    %v592 = vpop.f32.mrf.mxu0
    %v593 = vadd.f32 %v502, %v592
    %v594 = vpop.f32.mrf.mxu0
    %v595 = vpop.f32.mrf.mxu0
    %v596 = vadd.f32 %v502, %v595
    %v597 = vpop.f32.mrf.mxu0
    %598 = vdwg.mxu0
    %599 = vst [vmem:[#allocation12] sm:$0xff] %v593
    %600 = vst [vmem:[#allocation12 + $0x8] sm:$0xff] %v596
    // Predicated region
    $region62: #{tpu_custom_call.1} parent=1 // pred_check
      _
    $region63: #{tpu_custom_call.1} parent=1 // pred_check_branch
      %602 = sbr.rel (0) target = $region65
    $region64: #{tpu_custom_call.1} parent=1 // pred_region
      %s604 = ssub.s32 256, 256
      %605 = vsyncadd [#allocation5], %s604
      %s606 = sshll.u32 [#allocation12], 4
      %s607 = int_to_ptr.vmem [resolvable:$true] %s606
      %612 = dma.vmem_to_hbm [thread:$0]  %s607, 256, %s9, [#allocation5], 128, 128, 8
    $region65: #{tpu_custom_call.1} parent=1 // pred_fallthru
      _
    // Predicated region
    $region66: #{tpu_custom_call.1} parent=1 // pred_check
      _
    $region67: #{tpu_custom_call.1} parent=1 // pred_check_branch
      %614 = sbr.rel (0) target = $region69
    $region68: #{tpu_custom_call.1} parent=1 // pred_region
      %615 = dma.done [#allocation5], 256
    $region69: #{tpu_custom_call.1} parent=1 // pred_fallthru
      _
    %616 = vsyncpa [#allocation4], 1
    %617 = vsyncpa [#allocation7], 1
    %618 = vsyncpa [#allocation10], 1
    %619 = vsyncpa [#allocation5], 1

</llo_original>
